<compile_context>
chip_gen: v7x
topology: tpu7x:2x2x1
jax: 0.10.0
libtpu: 0.0.40
codegen_flags: <defaults>
</compile_context>

<pallas_src>
import jax
import jax.numpy as jnp
from jax.experimental import pallas as pl
from jax.experimental.pallas import tpu as pltpu

_LANE = 128
_SUB = 8


def _outconv_kernel(w_ref, b_ref, x_ref, o_ref):
    # w_ref: SMEM (C_out, C_in) f32      b_ref: SMEM (C_out,) f32
    # x_ref: VMEM (nb, C_in, tp, 128)    o_ref: VMEM (nb, C_out, tp, 128)
    c_in = x_ref.shape[1]
    c_out = o_ref.shape[1]
    # Hoisted channel loads: each (nb, tp, 128) slab is read once and reused
    # for every output channel (keeps the vld slot off the critical path).
    xs = [x_ref[:, ci, :, :].astype(jnp.float32) for ci in range(c_in)]
    for co in range(c_out):
        acc = xs[0] * w_ref[co, 0]
        for ci in range(1, c_in):
            acc = acc + xs[ci] * w_ref[co, ci]
        o_ref[:, co, :, :] = (acc + b_ref[co]).astype(o_ref.dtype)


def _default_tile_sublanes():
    # Pure HBM-streaming kernel (~0.86 FLOP/byte): amortize the ~0.35us/step
    # fixed cost with big tiles.  v7x HBM is ~2.3x v6e per TC -> need ~2x the
    # tile for the same roofline fraction; its 64 MiB VMEM still fits 2048
    # rows (14.7 MiB double-buffered).  v5e/v6e: 1024 rows (7.3 MiB) fits the
    # 16/32 MiB scoped-VMEM defaults without any flag changes.
    try:
        kind = jax.devices()[0].device_kind.lower()
    except Exception:
        return 1024
    return 2048 if "v7" in kind else 1024


def out_conv(x_nchw, weight, bias, *, tile_sublanes=None):
    """1x1 Conv2d forward (NCHW), matching nn.Conv2d(in, out, kernel_size=1).

    x_nchw: (N, C_in, H, W)
    weight: (C_out, C_in, 1, 1)   (PyTorch conv weight layout)
    bias:   (C_out,)
    returns (N, C_out, H, W)
    """
    N, C_in, H, W = x_nchw.shape
    C_out = weight.shape[0]
    HW = H * W
    if tile_sublanes is None:
        tile_sublanes = _default_tile_sublanes()

    p_rows = pl.cdiv(HW, _LANE)          # pixel rows of 128 lanes each
    hw_pad = p_rows * _LANE

    x3 = x_nchw.reshape(N, C_in, HW)
    if hw_pad != HW:
        # Only when H*W is not a multiple of 128: repacking onto 128 lanes
        # needs a real copy.
        # TODO(synk): masked-tail packing to avoid this extra HBM pass.
        x3 = jnp.pad(x3, ((0, 0), (0, 0), (0, hw_pad - HW)))
    x4 = x3.reshape(N, C_in, p_rows, _LANE)

    w_mat = weight.reshape(C_out, C_in).astype(jnp.float32)   # 12 scalars -> SMEM
    b_vec = bias.reshape(C_out).astype(jnp.float32)           # 3 scalars  -> SMEM

    if p_rows <= 64:
        # Small images: fold the batch into the block so the per-step fixed
        # cost is paid once (grid of 1 for the 16x16 demo).
        nb = max(1, min(N, tile_sublanes // p_rows))
        tp = p_rows
        grid = (pl.cdiv(N, nb),)
        x_spec = pl.BlockSpec((nb, C_in, tp, _LANE), lambda i: (i, 0, 0, 0))
        o_spec = pl.BlockSpec((nb, C_out, tp, _LANE), lambda i: (i, 0, 0, 0))
        dims = ("parallel",)
    else:
        nb = 1
        tp = min(tile_sublanes, p_rows)
        if N == 1 and pl.cdiv(p_rows, tp) < 2:
            # v7x has 2 TensorCores: give the parallel pixel axis >= 2 steps.
            tp = ((-(-p_rows // 2) + _SUB - 1) // _SUB) * _SUB
        grid = (N, pl.cdiv(p_rows, tp))   # partial last pixel tile is masked
        x_spec = pl.BlockSpec((1, C_in, tp, _LANE), lambda n, j: (n, 0, j, 0))
        o_spec = pl.BlockSpec((1, C_out, tp, _LANE), lambda n, j: (n, 0, j, 0))
        dims = ("parallel", "parallel")

    # Double-buffered per-step working set, with headroom (safe on all gens).
    itemsize = jnp.dtype(x_nchw.dtype).itemsize
    blk_bytes = nb * (C_in + C_out) * tp * _LANE * itemsize
    vmem_limit = int(min(max(2 * blk_bytes + (1 << 20), 24 * 1024 * 1024),
                         128 * 1024 * 1024))

    out4 = pl.pallas_call(
        _outconv_kernel,
        out_shape=jax.ShapeDtypeStruct((N, C_out, p_rows, _LANE), x_nchw.dtype),
        grid=grid,
        in_specs=[
            pl.BlockSpec(memory_space=pltpu.MemorySpace.SMEM),   # weight
            pl.BlockSpec(memory_space=pltpu.MemorySpace.SMEM),   # bias
            x_spec,                                              # x (VMEM tiles)
        ],
        out_specs=o_spec,
        compiler_params=pltpu.CompilerParams(
            dimension_semantics=dims, vmem_limit_bytes=vmem_limit),
    )(w_mat, b_vec, x4)

    out3 = out4.reshape(N, C_out, hw_pad)
    if hw_pad != HW:
        out3 = out3[:, :, :HW]
    return out3.reshape(N, C_out, H, W)


if __name__ == "__main__":
    # Small shapes consistent with OutConv: batch=2, in_channels=4,
    # out_channels=3, spatial=16x16.
    N, C_in, C_out, H, W = 2, 4, 3, 16, 16

    key = jax.random.PRNGKey(0)
    kx, kw, kb = jax.random.split(key, 3)

    x = jax.random.normal(kx, (N, C_in, H, W), dtype=jnp.float32)
    # Deterministic synthetic parameters (shapes from nn.Conv2d(in, out, 1)).
    weight = jax.random.normal(kw, (C_out, C_in, 1, 1), dtype=jnp.float32) * 0.1
    bias = jax.random.normal(kb, (C_out,), dtype=jnp.float32) * 0.1

    out = jax.block_until_ready(out_conv(x, weight, bias))

    # Sanity check against a plain-JAX reference (einsum over channels).
    ref = jnp.einsum("nchw,oc->nohw", x, weight.reshape(C_out, C_in)) \
          + bias.reshape(1, C_out, 1, 1)
    assert out.shape == (N, C_out, H, W)
    assert jnp.allclose(out, ref, atol=1e-5, rtol=1e-5)

    print("KERNEL_OK")
</pallas_src>

<mosaic_0001>
module attributes {stable_mosaic.version = 11 : i64} {
  func.func @_outconv_kernel(%arg0: i32, %arg1: memref<3x4xf32, #tpu.memory_space<smem>>, %arg2: memref<3xf32, #tpu.memory_space<smem>>, %arg3: memref<2x4x2x128xf32, #tpu.memory_space<vmem>>, %arg4: memref<2x3x2x128xf32, #tpu.memory_space<vmem>>) attributes {dimension_semantics = [#tpu.dimension_semantics<parallel>], iteration_bounds = array<i64: 1>, scalar_prefetch = 0 : i64, scratch_operands = 0 : i64, tpu.core_type = #tpu.core_type<tc>, window_params = [{transform_indices = @transform_0, window_bounds = array<i64: 3, 4>}, {transform_indices = @transform_1, window_bounds = array<i64: 3>}, {transform_indices = @transform_2, window_bounds = array<i64: 2, 4, 2, 128>}, {transform_indices = @transform_3, window_bounds = array<i64: 2, 3, 2, 128>}]} {
    %c0 = arith.constant 0 : index
    %c0_0 = arith.constant 0 : index
    %c0_1 = arith.constant 0 : index
    %c0_2 = arith.constant 0 : index
    %0 = vector.load %arg3[%c0, %c0_0, %c0_1, %c0_2] : memref<2x4x2x128xf32, #tpu.memory_space<vmem>>, vector<2x1x2x128xf32>
    %1 = vector.shape_cast %0 : vector<2x1x2x128xf32> to vector<2x2x128xf32>
    %c0_3 = arith.constant 0 : index
    %c1 = arith.constant 1 : index
    %c0_4 = arith.constant 0 : index
    %c0_5 = arith.constant 0 : index
    %2 = vector.load %arg3[%c0_3, %c1, %c0_4, %c0_5] : memref<2x4x2x128xf32, #tpu.memory_space<vmem>>, vector<2x1x2x128xf32>
    %3 = vector.shape_cast %2 : vector<2x1x2x128xf32> to vector<2x2x128xf32>
    %c0_6 = arith.constant 0 : index
    %c2 = arith.constant 2 : index
    %c0_7 = arith.constant 0 : index
    %c0_8 = arith.constant 0 : index
    %4 = vector.load %arg3[%c0_6, %c2, %c0_7, %c0_8] : memref<2x4x2x128xf32, #tpu.memory_space<vmem>>, vector<2x1x2x128xf32>
    %5 = vector.shape_cast %4 : vector<2x1x2x128xf32> to vector<2x2x128xf32>
    %c0_9 = arith.constant 0 : index
    %c3 = arith.constant 3 : index
    %c0_10 = arith.constant 0 : index
    %c0_11 = arith.constant 0 : index
    %6 = vector.load %arg3[%c0_9, %c3, %c0_10, %c0_11] : memref<2x4x2x128xf32, #tpu.memory_space<vmem>>, vector<2x1x2x128xf32>
    %7 = vector.shape_cast %6 : vector<2x1x2x128xf32> to vector<2x2x128xf32>
    %c0_12 = arith.constant 0 : index
    %c0_13 = arith.constant 0 : index
    %8 = memref.load %arg1[%c0_12, %c0_13] : memref<3x4xf32, #tpu.memory_space<smem>>
    %9 = vector.broadcast %8 : f32 to vector<2x2x128xf32>
    %10 = arith.mulf %1, %9 : vector<2x2x128xf32>
    %c0_14 = arith.constant 0 : index
    %c1_15 = arith.constant 1 : index
    %11 = memref.load %arg1[%c0_14, %c1_15] : memref<3x4xf32, #tpu.memory_space<smem>>
    %12 = vector.broadcast %11 : f32 to vector<2x2x128xf32>
    %13 = arith.mulf %3, %12 : vector<2x2x128xf32>
    %14 = arith.addf %10, %13 : vector<2x2x128xf32>
    %c0_16 = arith.constant 0 : index
    %c2_17 = arith.constant 2 : index
    %15 = memref.load %arg1[%c0_16, %c2_17] : memref<3x4xf32, #tpu.memory_space<smem>>
    %16 = vector.broadcast %15 : f32 to vector<2x2x128xf32>
    %17 = arith.mulf %5, %16 : vector<2x2x128xf32>
    %18 = arith.addf %14, %17 : vector<2x2x128xf32>
    %c0_18 = arith.constant 0 : index
    %c3_19 = arith.constant 3 : index
    %19 = memref.load %arg1[%c0_18, %c3_19] : memref<3x4xf32, #tpu.memory_space<smem>>
    %20 = vector.broadcast %19 : f32 to vector<2x2x128xf32>
    %21 = arith.mulf %7, %20 : vector<2x2x128xf32>
    %22 = arith.addf %18, %21 : vector<2x2x128xf32>
    %c0_20 = arith.constant 0 : index
    %23 = memref.load %arg2[%c0_20] : memref<3xf32, #tpu.memory_space<smem>>
    %24 = vector.broadcast %23 : f32 to vector<2x2x128xf32>
    %25 = arith.addf %22, %24 : vector<2x2x128xf32>
    %c0_21 = arith.constant 0 : index
    %c0_22 = arith.constant 0 : index
    %c0_23 = arith.constant 0 : index
    %c0_24 = arith.constant 0 : index
    %26 = vector.load %arg4[%c0_21, %c0_22, %c0_23, %c0_24] : memref<2x3x2x128xf32, #tpu.memory_space<vmem>>, vector<2x1x2x128xf32>
    %27 = vector.shape_cast %26 : vector<2x1x2x128xf32> to vector<2x2x128xf32>
    %28 = vector.shape_cast %25 : vector<2x2x128xf32> to vector<2x1x2x128xf32>
    tpu.vector_store %arg4[%c0_21, %c0_22, %c0_23, %c0_24], %28 {strides = array<i32>} : memref<2x3x2x128xf32, #tpu.memory_space<vmem>>, vector<2x1x2x128xf32>,
    %c1_25 = arith.constant 1 : index
    %c0_26 = arith.constant 0 : index
    %29 = memref.load %arg1[%c1_25, %c0_26] : memref<3x4xf32, #tpu.memory_space<smem>>
    %30 = vector.broadcast %29 : f32 to vector<2x2x128xf32>
    %31 = arith.mulf %1, %30 : vector<2x2x128xf32>
    %c1_27 = arith.constant 1 : index
    %c1_28 = arith.constant 1 : index
    %32 = memref.load %arg1[%c1_27, %c1_28] : memref<3x4xf32, #tpu.memory_space<smem>>
    %33 = vector.broadcast %32 : f32 to vector<2x2x128xf32>
    %34 = arith.mulf %3, %33 : vector<2x2x128xf32>
    %35 = arith.addf %31, %34 : vector<2x2x128xf32>
    %c1_29 = arith.constant 1 : index
    %c2_30 = arith.constant 2 : index
    %36 = memref.load %arg1[%c1_29, %c2_30] : memref<3x4xf32, #tpu.memory_space<smem>>
    %37 = vector.broadcast %36 : f32 to vector<2x2x128xf32>
    %38 = arith.mulf %5, %37 : vector<2x2x128xf32>
    %39 = arith.addf %35, %38 : vector<2x2x128xf32>
    %c1_31 = arith.constant 1 : index
    %c3_32 = arith.constant 3 : index
    %40 = memref.load %arg1[%c1_31, %c3_32] : memref<3x4xf32, #tpu.memory_space<smem>>
    %41 = vector.broadcast %40 : f32 to vector<2x2x128xf32>
    %42 = arith.mulf %7, %41 : vector<2x2x128xf32>
    %43 = arith.addf %39, %42 : vector<2x2x128xf32>
    %c1_33 = arith.constant 1 : index
    %44 = memref.load %arg2[%c1_33] : memref<3xf32, #tpu.memory_space<smem>>
    %45 = vector.broadcast %44 : f32 to vector<2x2x128xf32>
    %46 = arith.addf %43, %45 : vector<2x2x128xf32>
    %c0_34 = arith.constant 0 : index
    %c1_35 = arith.constant 1 : index
    %c0_36 = arith.constant 0 : index
    %c0_37 = arith.constant 0 : index
    %47 = vector.load %arg4[%c0_34, %c1_35, %c0_36, %c0_37] : memref<2x3x2x128xf32, #tpu.memory_space<vmem>>, vector<2x1x2x128xf32>
    %48 = vector.shape_cast %47 : vector<2x1x2x128xf32> to vector<2x2x128xf32>
    %49 = vector.shape_cast %46 : vector<2x2x128xf32> to vector<2x1x2x128xf32>
    tpu.vector_store %arg4[%c0_34, %c1_35, %c0_36, %c0_37], %49 {strides = array<i32>} : memref<2x3x2x128xf32, #tpu.memory_space<vmem>>, vector<2x1x2x128xf32>,
    %c2_38 = arith.constant 2 : index
    %c0_39 = arith.constant 0 : index
    %50 = memref.load %arg1[%c2_38, %c0_39] : memref<3x4xf32, #tpu.memory_space<smem>>
    %51 = vector.broadcast %50 : f32 to vector<2x2x128xf32>
    %52 = arith.mulf %1, %51 : vector<2x2x128xf32>
    %c2_40 = arith.constant 2 : index
    %c1_41 = arith.constant 1 : index
    %53 = memref.load %arg1[%c2_40, %c1_41] : memref<3x4xf32, #tpu.memory_space<smem>>
    %54 = vector.broadcast %53 : f32 to vector<2x2x128xf32>
    %55 = arith.mulf %3, %54 : vector<2x2x128xf32>
    %56 = arith.addf %52, %55 : vector<2x2x128xf32>
    %c2_42 = arith.constant 2 : index
    %c2_43 = arith.constant 2 : index
    %57 = memref.load %arg1[%c2_42, %c2_43] : memref<3x4xf32, #tpu.memory_space<smem>>
    %58 = vector.broadcast %57 : f32 to vector<2x2x128xf32>
    %59 = arith.mulf %5, %58 : vector<2x2x128xf32>
    %60 = arith.addf %56, %59 : vector<2x2x128xf32>
    %c2_44 = arith.constant 2 : index
    %c3_45 = arith.constant 3 : index
    %61 = memref.load %arg1[%c2_44, %c3_45] : memref<3x4xf32, #tpu.memory_space<smem>>
    %62 = vector.broadcast %61 : f32 to vector<2x2x128xf32>
    %63 = arith.mulf %7, %62 : vector<2x2x128xf32>
    %64 = arith.addf %60, %63 : vector<2x2x128xf32>
    %c2_46 = arith.constant 2 : index
    %65 = memref.load %arg2[%c2_46] : memref<3xf32, #tpu.memory_space<smem>>
    %66 = vector.broadcast %65 : f32 to vector<2x2x128xf32>
    %67 = arith.addf %64, %66 : vector<2x2x128xf32>
    %c0_47 = arith.constant 0 : index
    %c2_48 = arith.constant 2 : index
    %c0_49 = arith.constant 0 : index
    %c0_50 = arith.constant 0 : index
    %68 = vector.load %arg4[%c0_47, %c2_48, %c0_49, %c0_50] : memref<2x3x2x128xf32, #tpu.memory_space<vmem>>, vector<2x1x2x128xf32>
    %69 = vector.shape_cast %68 : vector<2x1x2x128xf32> to vector<2x2x128xf32>
    %70 = vector.shape_cast %67 : vector<2x2x128xf32> to vector<2x1x2x128xf32>
    tpu.vector_store %arg4[%c0_47, %c2_48, %c0_49, %c0_50], %70 {strides = array<i32>} : memref<2x3x2x128xf32, #tpu.memory_space<vmem>>, vector<2x1x2x128xf32>,
    return
  }
  func.func @transform_0(%arg0: i32) -> (i32, i32) {
    %c0_i32 = arith.constant 0 : i32
    %c0_i32_0 = arith.constant 0 : i32
    %c0_i32_1 = arith.constant 0 : i32
    return %c0_i32, %c0_i32_0 : i32, i32
  }
  func.func @transform_1(%arg0: i32) -> i32 {
    %c0_i32 = arith.constant 0 : i32
    %c0_i32_0 = arith.constant 0 : i32
    return %c0_i32 : i32
  }
  func.func @transform_2(%arg0: i32) -> (i32, i32, i32, i32) {
    %c0_i32 = arith.constant 0 : i32
    %c0_i32_0 = arith.constant 0 : i32
    %c0_i32_1 = arith.constant 0 : i32
    %c0_i32_2 = arith.constant 0 : i32
    return %arg0, %c0_i32, %c0_i32_0, %c0_i32_1 : i32, i32, i32, i32
  }
  func.func @transform_3(%arg0: i32) -> (i32, i32, i32, i32) {
    %c0_i32 = arith.constant 0 : i32
    %c0_i32_0 = arith.constant 0 : i32
    %c0_i32_1 = arith.constant 0 : i32
    %c0_i32_2 = arith.constant 0 : i32
    return %arg0, %c0_i32, %c0_i32_0, %c0_i32_1 : i32, i32, i32, i32
  }
}

</mosaic_0001>

<llo_original>
// kernel: tpu_custom_call.1
$region0: #{tpu_custom_call.1}
  #allocation0 [shape = 'u32[]', space=smem, size = 0x4, offset = 0x4, fixed_abs, tag = 'smem constant byte address 0x4 - core index']
  #allocation1 [shape = 'u32[144,128]{1,0:T(1,128)}', space=vmem, size = 0x12000, scoped, tag = 'internal scratch']
  %s0 = inlined_call_operand.hbm [shape: f32[3,4], index: 0, kind: input, shape index: {}]
  %s1 = inlined_call_operand.vmem [shape: f32[3], index: 1, kind: input, shape index: {}]
  %s2 = inlined_call_operand.hbm [shape: f32[2,4,2,128], index: 2, kind: input, shape index: {}]
  %s3 = inlined_call_operand.hbm [shape: f32[2,3,2,128], index: 3, kind: output, shape index: {}]
  %s4 = sld [smem:[#allocation0]]
  $region34: #{tpu_custom_call.1} parent=0
    _
  %s6 = ssub.s32 1, %s4
  %s7 = scalar_select 0, %s6, %s4
  $region1: #{tpu_custom_call.1} parent=0
    #allocation2 [shape = 'u8[2048]{0}', space=smem, size = 0x800, scoped, tag = 'input window, operand 0, single buffered']
    #allocation3 [shape = 's32[1]{0}', space=sflag, size = 0x4, scoped, tag = 'scoped memory for tpu_custom_call.1']
    #allocation4 [shape = 's32[1]{0}', space=sflag, size = 0x4, scoped, tag = 'scoped memory for tpu_custom_call.1']
    #allocation5 [shape = 's32[1]{0}', space=sflag, size = 0x4, scoped, tag = 'scoped memory for tpu_custom_call.1']
    #allocation6 [shape = 's32[1]{0}', space=sflag, size = 0x4, scoped, tag = 'scoped memory for tpu_custom_call.1']
    #allocation7 [shape = 'u8[512]{0}', space=smem, size = 0x200, scoped, tag = 'input window, operand 1, single buffered']
    #allocation8 [shape = 'u8[8192]{0}', space=vmem, size = 0x2000, scoped, tag = 'input window, operand 2, single buffered']
    #allocation9 [shape = 'u8[6144]{0}', space=vmem, size = 0x1800, scoped, tag = 'output window, operand 0, single buffered']
    %8 = vsyncpa [#allocation5], 0
    %9 = vsyncpa [#allocation6], 0
    %10 = vsyncpa [#allocation3], 0
    %11 = vsyncpa [#allocation4], 0
    // Predicated region
    $region2: #{tpu_custom_call.1} parent=1 // pred_check
      _
    $region3: #{tpu_custom_call.1} parent=1 // pred_check_branch
      %13 = sbr.rel (0) target = $region5
    $region4: #{tpu_custom_call.1} parent=1 // pred_region
      %s15 = ssub.s32 64, 64
      %16 = vsyncadd [#allocation5], %s15
      %19 = dma.hbm_to_smem %s0, 64, [#allocation2], [#allocation5]
    $region5: #{tpu_custom_call.1} parent=1 // pred_fallthru
      _
    // Predicated region
    $region6: #{tpu_custom_call.1} parent=1 // pred_check
      _
    $region7: #{tpu_custom_call.1} parent=1 // pred_check_branch
      %21 = sbr.rel (0) target = $region9
    $region8: #{tpu_custom_call.1} parent=1 // pred_region
      %s23 = ssub.s32 16, 16
      %24 = vsyncadd [#allocation6], %s23
      %s26 = sshll.u32 %s1, 4
      %s27 = int_to_ptr.vmem [resolvable:$true] %s26
      %29 = dma.vmem_to_smem %s27, 16, [#allocation7], [#allocation6]
    $region9: #{tpu_custom_call.1} parent=1 // pred_fallthru
      _
    // Predicated region
    $region10: #{tpu_custom_call.1} parent=1 // pred_check
      _
    $region11: #{tpu_custom_call.1} parent=1 // pred_check_branch
      %31 = sbr.rel (0) target = $region13
    $region12: #{tpu_custom_call.1} parent=1 // pred_region
      %s33 = ssub.s32 256, 256
      %34 = vsyncadd [#allocation3], %s33
      %s35 = sshll.u32 [#allocation8], 4
      %s36 = int_to_ptr.vmem [resolvable:$true] %s35
      %41 = dma.hbm_to_vmem [thread:$0]  %s2, 256, %s36, [#allocation3], 32, 32, 2
    $region13: #{tpu_custom_call.1} parent=1 // pred_fallthru
      _
    // Predicated region
    $region14: #{tpu_custom_call.1} parent=1 // pred_check
      _
    $region15: #{tpu_custom_call.1} parent=1 // pred_check_branch
      %43 = sbr.rel (0) target = $region17
    $region16: #{tpu_custom_call.1} parent=1 // pred_region
      %44 = dma.done [#allocation5], 64
    $region17: #{tpu_custom_call.1} parent=1 // pred_fallthru
      _
    // Predicated region
    $region18: #{tpu_custom_call.1} parent=1 // pred_check
      _
    $region19: #{tpu_custom_call.1} parent=1 // pred_check_branch
      %46 = sbr.rel (0) target = $region21
    $region20: #{tpu_custom_call.1} parent=1 // pred_region
      %47 = dma.done [#allocation6], 16
    $region21: #{tpu_custom_call.1} parent=1 // pred_fallthru
      _
    // Predicated region
    $region22: #{tpu_custom_call.1} parent=1 // pred_check
      _
    $region23: #{tpu_custom_call.1} parent=1 // pred_check_branch
      %49 = sbr.rel (0) target = $region25
    $region24: #{tpu_custom_call.1} parent=1 // pred_region
      %50 = dma.done [#allocation3], 256
    $region25: #{tpu_custom_call.1} parent=1 // pred_fallthru
      _
    %51 = sfence
    %v52 = vld [vmem:[#allocation8] sm:$0x3]
    %v53 = vld [vmem:[#allocation8 + $0x8] sm:$0x3]
    %s54 = scalar_lea.vmem [#allocation8], 2
    %v55 = vld [vmem:[%s54] sm:$0x3]
    %v56 = vld [vmem:[%s54 + $0x8] sm:$0x3]
    %s57 = scalar_lea.vmem [#allocation8], 4
    %v58 = vld [vmem:[%s57] sm:$0x3]
    %v59 = vld [vmem:[%s57 + $0x8] sm:$0x3]
    %s60 = scalar_lea.vmem [#allocation8], 6
    %v61 = vld [vmem:[%s60] sm:$0x3]
    %v62 = vld [vmem:[%s60 + $0x8] sm:$0x3]
    %s63 = sld [smem:[#allocation2]]
    %v64 = vstv %s63
    %v65 = vmul.f32 %v52, %v64
    %v66 = vmul.f32 %v53, %v64
    %s67 = sld [smem:[#allocation2 + $0x1]]
    %v68 = vstv %s67
    %v69 = vmul.f32 %v55, %v68
    %v70 = vmul.f32 %v56, %v68
    %v71 = vadd.f32 %v65, %v69
    %v72 = vadd.f32 %v66, %v70
    %s73 = sld [smem:[#allocation2 + $0x2]]
    %v74 = vstv %s73
    %v75 = vmul.f32 %v58, %v74
    %v76 = vmul.f32 %v59, %v74
    %v77 = vadd.f32 %v71, %v75
    %v78 = vadd.f32 %v72, %v76
    %s79 = sld [smem:[#allocation2 + $0x3]]
    %v80 = vstv %s79
    %v81 = vmul.f32 %v61, %v80
    %v82 = vmul.f32 %v62, %v80
    %v83 = vadd.f32 %v77, %v81
    %v84 = vadd.f32 %v78, %v82
    %s85 = sld [smem:[#allocation7]]
    %v86 = vstv %s85
    %v87 = vadd.f32 %v83, %v86
    %v88 = vadd.f32 %v84, %v86
    %89 = vst [vmem:[#allocation9] sm:$0x3] %v87
    %90 = vst [vmem:[#allocation9 + $0x6] sm:$0x3] %v88
    %s91 = sld [smem:[#allocation2 + $0x80]]
    %v92 = vstv %s91
    %v93 = vmul.f32 %v52, %v92
    %v94 = vmul.f32 %v53, %v92
    %s95 = sld [smem:[#allocation2 + $0x81]]
    %v96 = vstv %s95
    %v97 = vmul.f32 %v55, %v96
    %v98 = vmul.f32 %v56, %v96
    %v99 = vadd.f32 %v93, %v97
    %v100 = vadd.f32 %v94, %v98
    %s101 = sld [smem:[#allocation2 + $0x82]]
    %v102 = vstv %s101
    %v103 = vmul.f32 %v58, %v102
    %v104 = vmul.f32 %v59, %v102
    %v105 = vadd.f32 %v99, %v103
    %v106 = vadd.f32 %v100, %v104
    %s107 = sld [smem:[#allocation2 + $0x83]]
    %v108 = vstv %s107
    %v109 = vmul.f32 %v61, %v108
    %v110 = vmul.f32 %v62, %v108
    %v111 = vadd.f32 %v105, %v109
    %v112 = vadd.f32 %v106, %v110
    %s113 = sld [smem:[#allocation7 + $0x1]]
    %v114 = vstv %s113
    %v115 = vadd.f32 %v111, %v114
    %v116 = vadd.f32 %v112, %v114
    %s117 = scalar_lea.vmem [#allocation9], 2
    %118 = vst [vmem:[%s117] sm:$0x3] %v115
    %119 = vst [vmem:[%s117 + $0x6] sm:$0x3] %v116
    %s120 = sld [smem:[#allocation2 + $0x100]]
    %v121 = vstv %s120
    %v122 = vmul.f32 %v52, %v121
    %v123 = vmul.f32 %v53, %v121
    %s124 = sld [smem:[#allocation2 + $0x101]]
    %v125 = vstv %s124
    %v126 = vmul.f32 %v55, %v125
    %v127 = vmul.f32 %v56, %v125
    %v128 = vadd.f32 %v122, %v126
    %v129 = vadd.f32 %v123, %v127
    %s130 = sld [smem:[#allocation2 + $0x102]]
    %v131 = vstv %s130
    %v132 = vmul.f32 %v58, %v131
    %v133 = vmul.f32 %v59, %v131
    %v134 = vadd.f32 %v128, %v132
    %v135 = vadd.f32 %v129, %v133
    %s136 = sld [smem:[#allocation2 + $0x103]]
    %v137 = vstv %s136
    %v138 = vmul.f32 %v61, %v137
    %v139 = vmul.f32 %v62, %v137
    %v140 = vadd.f32 %v134, %v138
    %v141 = vadd.f32 %v135, %v139
    %s142 = sld [smem:[#allocation7 + $0x2]]
    %v143 = vstv %s142
    %v144 = vadd.f32 %v140, %v143
    %v145 = vadd.f32 %v141, %v143
    %s146 = scalar_lea.vmem [#allocation9], 4
    %147 = vst [vmem:[%s146] sm:$0x3] %v144
    %148 = vst [vmem:[%s146 + $0x6] sm:$0x3] %v145
    // Predicated region
    $region26: #{tpu_custom_call.1} parent=1 // pred_check
      _
    $region27: #{tpu_custom_call.1} parent=1 // pred_check_branch
      %150 = sbr.rel (0) target = $region29
    $region28: #{tpu_custom_call.1} parent=1 // pred_region
      %s152 = ssub.s32 192, 192
      %153 = vsyncadd [#allocation4], %s152
      %s154 = sshll.u32 [#allocation9], 4
      %s155 = int_to_ptr.vmem [resolvable:$true] %s154
      %160 = dma.vmem_to_hbm [thread:$0]  %s155, 192, %s3, [#allocation4], 32, 32, 2
    $region29: #{tpu_custom_call.1} parent=1 // pred_fallthru
      _
    // Predicated region
    $region30: #{tpu_custom_call.1} parent=1 // pred_check
      _
    $region31: #{tpu_custom_call.1} parent=1 // pred_check_branch
      %162 = sbr.rel (0) target = $region33
    $region32: #{tpu_custom_call.1} parent=1 // pred_region
      %163 = dma.done [#allocation4], 192
    $region33: #{tpu_custom_call.1} parent=1 // pred_fallthru
      _
    %164 = vsyncpa [#allocation3], 1
    %165 = vsyncpa [#allocation4], 1
    %166 = vsyncpa [#allocation5], 1
    %167 = vsyncpa [#allocation6], 1

</llo_original>
